<compile_context>
chip_gen: v5e
topology: v5e:2x2
jax: 0.10.0
libtpu: 0.0.40
codegen_flags: <defaults>
</compile_context>

<pallas_src>
import functools
import math

import jax
import jax.numpy as jnp
from jax.experimental import pallas as pl
from jax.experimental.pallas import tpu as pltpu


# -----------------------------------------------------------------------------
# In-kernel helpers (operate on values already resident in vregs/VMEM)
# -----------------------------------------------------------------------------
def _layernorm(x, g, b, eps=1e-5):
    mu = jnp.mean(x, axis=-1, keepdims=True)
    var = jnp.mean((x - mu) ** 2, axis=-1, keepdims=True)
    return (x - mu) * jax.lax.rsqrt(var + eps) * g + b


def _mlp(x, w1, b1, w2, b2):
    h = jnp.dot(x, w1, preferred_element_type=jnp.float32) + b1
    h = jax.nn.gelu(h, approximate=False)   # exact erf GELU == torch.nn.GELU()
    return jnp.dot(h, w2, preferred_element_type=jnp.float32) + b2


def _mha(xq, xkv, attn_refs, *, n_heads, scale):
    """Multi-head attention on small 2-D tiles.

    xq: (Lq, D), xkv: (Lk, D).  attn_refs = (wq, wk, wv, bq, bk, bv, wo, bo)
    with per-head packing wq/wk/wv: (H, D, E), bq/bk/bv: (H, 1, E),
    wo: (H, E, D), bo: (1, D).  Head concat is folded into a per-head
    output-projection accumulate (avoids lane-dim slicing/concat).
    """
    wq, wk, wv, bq, bk, bv, wo, bo = attn_refs
    acc = None
    for h in range(n_heads):
        q = jnp.dot(xq, wq[h], preferred_element_type=jnp.float32) + bq[h]
        k = jnp.dot(xkv, wk[h], preferred_element_type=jnp.float32) + bk[h]
        v = jnp.dot(xkv, wv[h], preferred_element_type=jnp.float32) + bv[h]
        s = jax.lax.dot_general(q * scale, k, (((1,), (1,)), ((), ())),
                                preferred_element_type=jnp.float32)   # (Lq, Lk)
        s = s - jnp.max(s, axis=-1, keepdims=True)
        p = jnp.exp(s)
        p = p * pl.reciprocal(jnp.sum(p, axis=-1, keepdims=True), approx=True)
        o_h = jnp.dot(p, v, preferred_element_type=jnp.float32)        # (Lq, E)
        contrib = jnp.dot(o_h, wo[h], preferred_element_type=jnp.float32)
        acc = contrib if acc is None else acc + contrib
    return acc + bo[...]


# -----------------------------------------------------------------------------
# Pallas kernels
# -----------------------------------------------------------------------------
def _embed_kernel(x_ref, w_ref, b_ref, pos_ref, g_ref, c_ref, o_ref):
    # x_ref: (1, C*in_len, patch_len) for one batch element
    h = jnp.dot(x_ref[0], w_ref[...], preferred_element_type=jnp.float32) + b_ref[...]
    h = h + pos_ref[...]
    o_ref[0] = _layernorm(h, g_ref[...], c_ref[...])


def _tsa_time_kernel(x_ref,
                     wq, wk, wv, bq, bk, bv, wo, bo,
                     g1, c1, mw1, mb1, mw2, mb2, g2, c2,
                     o_ref, *, n_heads, scale, n_groups):
    # x_ref: (1, C, seg, D) for one batch element; cross-time attention per channel.
    attn_refs = (wq, wk, wv, bq, bk, bv, wo, bo)
    g1v, c1v = g1[...], c1[...]
    g2v, c2v = g2[...], c2[...]
    w1v, b1v = mw1[...], mb1[...]
    w2v, b2v = mw2[...], mb2[...]
    for c in range(n_groups):
        x = x_ref[0, c]                                            # (seg, D)
        y = x + _mha(x, x, attn_refs, n_heads=n_heads, scale=scale)
        y = _layernorm(y, g1v, c1v)
        y = y + _mlp(y, w1v, b1v, w2v, b2v)
        y = _layernorm(y, g2v, c2v)
        o_ref[0, c] = y


def _tsa_dim_kernel(x_ref, r_ref,
                    swq, swk, swv, sbq, sbk, sbv, swo, sbo,
                    rwq, rwk, rwv, rbq, rbk, rbv, rwo, rbo,
                    g3, c3, mw1, mb1, mw2, mb2, g4, c4,
                    o_ref, *, n_heads, scale, n_groups):
    # x_ref: (1, seg, C, D) for one batch element; router-based cross-dim attention.
    send_refs = (swq, swk, swv, sbq, sbk, sbv, swo, sbo)
    recv_refs = (rwq, rwk, rwv, rbq, rbk, rbv, rwo, rbo)
    g3v, c3v = g3[...], c3[...]
    g4v, c4v = g4[...], c4[...]
    w1v, b1v = mw1[...], mb1[...]
    w2v, b2v = mw2[...], mb2[...]
    for s in range(n_groups):
        x = x_ref[0, s]                                            # (C, D)
        router = r_ref[s]                                          # (factor, D)
        buf = _mha(router, x, send_refs, n_heads=n_heads, scale=scale)  # (factor, D)
        rec = _mha(x, buf, recv_refs, n_heads=n_heads, scale=scale)     # (C, D)
        y = x + rec
        y = _layernorm(y, g3v, c3v)
        y = y + _mlp(y, w1v, b1v, w2v, b2v)
        y = _layernorm(y, g4v, c4v)
        o_ref[0, s] = y


def _merge_kernel(x_ref, g_ref, c_ref, w_ref, b_ref, o_ref):
    x = _layernorm(x_ref[...], g_ref[...], c_ref[...])
    o_ref[...] = jnp.dot(x, w_ref[...], preferred_element_type=jnp.float32) + b_ref[...]


def _head_kernel(x_ref, w1, b1, w2, b2, o_ref):
    x = jnp.tanh(x_ref[...])
    o_ref[...] = _mlp(x, w1[...], b1[...], w2[...], b2[...])


# -----------------------------------------------------------------------------
# Pallas wrappers
# -----------------------------------------------------------------------------
def _bcast_spec(arr):
    nd = arr.ndim
    return pl.BlockSpec(arr.shape, lambda *_: (0,) * nd)


def embed_patches(params, x, cfg):
    B, C, T = x.shape
    in_len = T // cfg.patch_len
    H = cfg.hidden
    xp = x.reshape(B, C * in_len, cfg.patch_len)
    pos = params["enc_pos_embedding"].reshape(C * in_len, H)
    w, b = params["patching"]["w"], params["patching"]["b"]
    g, c = params["pre_norm"]["g"], params["pre_norm"]["b"]
    out = pl.pallas_call(
        _embed_kernel,
        out_shape=jax.ShapeDtypeStruct((B, C * in_len, H), jnp.float32),
        grid=(B,),
        in_specs=[pl.BlockSpec((1, C * in_len, cfg.patch_len), lambda i: (i, 0, 0)),
                  _bcast_spec(w), _bcast_spec(b), _bcast_spec(pos),
                  _bcast_spec(g), _bcast_spec(c)],
        out_specs=pl.BlockSpec((1, C * in_len, H), lambda i: (i, 0, 0)),
        compiler_params=pltpu.CompilerParams(dimension_semantics=("parallel",)),
    )(xp, w, b, pos, g, c)
    return out.reshape(B, C, in_len, H)


def tsa_time_stage(p, x, n_heads):
    B, C, seg, D = x.shape
    scale = 1.0 / math.sqrt(D // n_heads)
    a = p["time_attn"]
    weights = [a["wq"], a["wk"], a["wv"], a["bq"], a["bk"], a["bv"], a["wo"], a["bo"],
               p["norm1"]["g"], p["norm1"]["b"],
               p["mlp1"]["w1"], p["mlp1"]["b1"], p["mlp1"]["w2"], p["mlp1"]["b2"],
               p["norm2"]["g"], p["norm2"]["b"]]
    kern = functools.partial(_tsa_time_kernel, n_heads=n_heads, scale=scale, n_groups=C)
    return pl.pallas_call(
        kern,
        out_shape=jax.ShapeDtypeStruct((B, C, seg, D), jnp.float32),
        grid=(B,),
        in_specs=[pl.BlockSpec((1, C, seg, D), lambda i: (i, 0, 0, 0))]
                 + [_bcast_spec(w) for w in weights],
        out_specs=pl.BlockSpec((1, C, seg, D), lambda i: (i, 0, 0, 0)),
        compiler_params=pltpu.CompilerParams(dimension_semantics=("parallel",)),
    )(x, *weights)


def tsa_dim_stage(p, x, n_heads):
    # x: (B, seg, C, D)   (dim_send layout)
    B, seg, C, D = x.shape
    scale = 1.0 / math.sqrt(D // n_heads)
    snd, rcv = p["dim_sender"], p["dim_receiver"]
    weights = [p["router"],
               snd["wq"], snd["wk"], snd["wv"], snd["bq"], snd["bk"], snd["bv"], snd["wo"], snd["bo"],
               rcv["wq"], rcv["wk"], rcv["wv"], rcv["bq"], rcv["bk"], rcv["bv"], rcv["wo"], rcv["bo"],
               p["norm3"]["g"], p["norm3"]["b"],
               p["mlp2"]["w1"], p["mlp2"]["b1"], p["mlp2"]["w2"], p["mlp2"]["b2"],
               p["norm4"]["g"], p["norm4"]["b"]]
    kern = functools.partial(_tsa_dim_kernel, n_heads=n_heads, scale=scale, n_groups=seg)
    return pl.pallas_call(
        kern,
        out_shape=jax.ShapeDtypeStruct((B, seg, C, D), jnp.float32),
        grid=(B,),
        in_specs=[pl.BlockSpec((1, seg, C, D), lambda i: (i, 0, 0, 0))]
                 + [_bcast_spec(w) for w in weights],
        out_specs=pl.BlockSpec((1, seg, C, D), lambda i: (i, 0, 0, 0)),
        compiler_params=pltpu.CompilerParams(dimension_semantics=("parallel",)),
    )(x, *weights)


def tsa_layer(p, x, n_heads):
    # x: (B, C, seg, D)
    y = tsa_time_stage(p, x, n_heads)          # cross-time stage (fused kernel)
    y = y.transpose(0, 2, 1, 3)                # (B, seg, C, D)
    y = tsa_dim_stage(p, y, n_heads)           # cross-dimension stage (fused kernel)
    return y.transpose(0, 2, 1, 3)             # (B, C, seg, D)


def seg_merging(p, x, win):
    B, C, seg, D = x.shape
    pad = (-seg) % win
    if pad:
        x = jnp.concatenate([x, x[:, :, -pad:, :]], axis=2)
    seg2 = x.shape[2] // win
    xm = jnp.concatenate([x[:, :, i::win, :] for i in range(win)], axis=-1)
    xf = xm.reshape(B * C * seg2, win * D)
    out = pl.pallas_call(
        _merge_kernel,
        out_shape=jax.ShapeDtypeStruct((B * C * seg2, D), jnp.float32),
        grid=(1,),
        in_specs=[pl.BlockSpec((B * C * seg2, win * D), lambda i: (0, 0)),
                  _bcast_spec(p["g"]), _bcast_spec(p["b"]),
                  _bcast_spec(p["w"]), _bcast_spec(p["bw"])],
        out_specs=pl.BlockSpec((B * C * seg2, D), lambda i: (0, 0)),
    )(xf, p["g"], p["b"], p["w"], p["bw"])
    return out.reshape(B, C, seg2, D)


def decoder_head(p, enc):
    B, F = enc.shape
    N = p["w2"].shape[1]
    return pl.pallas_call(
        _head_kernel,
        out_shape=jax.ShapeDtypeStruct((B, N), jnp.float32),
        grid=(1,),
        in_specs=[pl.BlockSpec((B, F), lambda i: (0, 0)),
                  _bcast_spec(p["w1"]), _bcast_spec(p["b1"]),
                  _bcast_spec(p["w2"]), _bcast_spec(p["b2"])],
        out_specs=pl.BlockSpec((B, N), lambda i: (0, 0)),
    )(enc, p["w1"], p["b1"], p["w2"], p["b2"])


def crossformer_forward(params, x, p_in, y_in, cfg):
    # task = 'detection' branch of the reference forward.
    # TODO(synk): 'onset_detection' loop and 'prediction' Decoder branch are not
    #             exercised for this configuration and are not implemented.
    del p_in, y_in
    x = embed_patches(params, x, cfg)                      # patch-embed + pos + pre_norm
    enc_out = [x]
    for i, blk in enumerate(params["encoder"]):
        if i > 0:
            x = seg_merging(blk["merge"], x, cfg.merge)
        x = tsa_layer(blk["tsa"], x, cfg.n_heads)
        enc_out.append(x)
    enc_mean = [o.mean(axis=2) for o in enc_out]           # (B, C, H) each
    enc = jnp.concatenate(enc_mean, axis=2)                # (B, C, (L+1)*H)
    enc = enc.reshape(enc.shape[0], -1)
    z = decoder_head(params["decoder"], enc)               # tanh+Linear+GELU+Linear fused
    return {"prob": jnp.squeeze(z, axis=-1)}


# -----------------------------------------------------------------------------
# Deterministic parameter initialization (synthetic weights, pre-packed per head)
# -----------------------------------------------------------------------------
def _dense(key, fan_in, fan_out, scale=0.02):
    w = scale * jax.random.normal(key, (fan_in, fan_out), jnp.float32)
    b = jnp.zeros((fan_out,), jnp.float32)
    return w, b


def _ln_params(dim):
    return {"g": jnp.ones((1, dim), jnp.float32), "b": jnp.zeros((1, dim), jnp.float32)}


def _init_attention(key, d_model, n_heads):
    e = d_model // n_heads
    ks = jax.random.split(key, 4)
    wq, bq = _dense(ks[0], d_model, d_model)
    wk, bk = _dense(ks[1], d_model, d_model)
    wv, bv = _dense(ks[2], d_model, d_model)
    wo, bo = _dense(ks[3], d_model, d_model)

    def split_w(w):   # (D, D) -> (n_heads, D, E); head h == columns [h*E:(h+1)*E]
        return w.reshape(d_model, n_heads, e).transpose(1, 0, 2)

    def split_b(b):   # (D,) -> (n_heads, 1, E)
        return b.reshape(n_heads, 1, e)

    return {"wq": split_w(wq), "bq": split_b(bq),
            "wk": split_w(wk), "bk": split_b(bk),
            "wv": split_w(wv), "bv": split_b(bv),
            "wo": wo.reshape(n_heads, e, d_model),   # rows grouped by head
            "bo": bo.reshape(1, d_model)}


def _init_mlp(key, d_model, d_ff):
    k1, k2 = jax.random.split(key)
    w1, b1 = _dense(k1, d_model, d_ff)
    w2, b2 = _dense(k2, d_ff, d_model)
    return {"w1": w1, "b1": b1.reshape(1, d_ff), "w2": w2, "b2": b2.reshape(1, d_model)}


def _init_tsa(key, seg_num, factor, d_model, d_ff, n_heads):
    ks = jax.random.split(key, 6)
    return {
        "time_attn": _init_attention(ks[0], d_model, n_heads),
        "dim_sender": _init_attention(ks[1], d_model, n_heads),
        "dim_receiver": _init_attention(ks[2], d_model, n_heads),
        "router": jax.random.normal(ks[3], (seg_num, factor, d_model), jnp.float32),
        "norm1": _ln_params(d_model), "norm2": _ln_params(d_model),
        "norm3": _ln_params(d_model), "norm4": _ln_params(d_model),
        "mlp1": _init_mlp(ks[4], d_model, d_ff),
        "mlp2": _init_mlp(ks[5], d_model, d_ff),
    }


def init_crossformer_params(key, cfg):
    in_len = cfg.window // cfg.patch_len
    H, C = cfg.hidden, cfg.n_channels
    keys = jax.random.split(key, 3 + cfg.enc_layer)
    pw, pb = _dense(keys[0], cfg.patch_len, H)
    params = {
        "patching": {"w": pw, "b": pb.reshape(1, H)},
        "enc_pos_embedding": jax.random.normal(keys[1], (1, C, in_len, H), jnp.float32),
        "pre_norm": _ln_params(H),
    }
    blocks = []
    seg = in_len
    for i in range(cfg.enc_layer):
        kb = jax.random.split(keys[2 + i], 2)
        blk = {}
        if i > 0:
            seg = int(math.ceil(seg / cfg.merge))
            mw, mb = _dense(kb[0], cfg.merge * H, H)
            blk["merge"] = {"g": jnp.ones((1, cfg.merge * H), jnp.float32),
                            "b": jnp.zeros((1, cfg.merge * H), jnp.float32),
                            "w": mw, "bw": mb.reshape(1, H)}
        blk["tsa"] = _init_tsa(kb[1], seg, cfg.n_router, H, 4 * H, cfg.n_heads)
        blocks.append(blk)
    params["encoder"] = blocks
    kd = jax.random.split(keys[2 + cfg.enc_layer], 2)
    w1, b1 = _dense(kd[0], C * H * (1 + cfg.enc_layer), H)
    w2, b2 = _dense(kd[1], H, cfg.n_classes)
    params["decoder"] = {"w1": w1, "b1": b1.reshape(1, H),
                         "w2": w2, "b2": b2.reshape(1, cfg.n_classes)}
    return params


# -----------------------------------------------------------------------------
# Main
# -----------------------------------------------------------------------------
class Args:
    hidden = 32
    window = 64
    horizon = 16
    patch_len = 8          # in_len = 64 // 8 = 8
    merge = 2
    preprocess = "raw"
    n_channels = 4
    enc_layer = 2
    dropout = 0.1          # inference: identity
    n_heads = 4
    n_router = 2
    onset_history_len = 4
    task = "detection"
    n_classes = 1


if __name__ == "__main__":
    cfg = Args()
    key = jax.random.PRNGKey(0)
    kx, kp = jax.random.split(key)

    x = jax.random.normal(kx, (2, cfg.n_channels, cfg.window), jnp.float32)
    p_dummy = jnp.zeros((2,), jnp.float32)
    y_dummy = jnp.zeros((2,), jnp.float32)

    params = init_crossformer_params(kp, cfg)
    out = crossformer_forward(params, x, p_dummy, y_dummy, cfg)
    jax.block_until_ready(out["prob"])
    assert out["prob"].shape == (2,), out["prob"].shape
    print("KERNEL_OK")
</pallas_src>

<mosaic_0001>
module attributes {stable_mosaic.version = 11 : i64} {
  func.func @_embed_kernel(%arg0: i32, %arg1: memref<1x32x8xf32, #tpu.memory_space<vmem>>, %arg2: memref<8x32xf32, #tpu.memory_space<vmem>>, %arg3: memref<1x32xf32, #tpu.memory_space<vmem>>, %arg4: memref<32x32xf32, #tpu.memory_space<vmem>>, %arg5: memref<1x32xf32, #tpu.memory_space<vmem>>, %arg6: memref<1x32xf32, #tpu.memory_space<vmem>>, %arg7: memref<1x32x32xf32, #tpu.memory_space<vmem>>) attributes {dimension_semantics = [#tpu.dimension_semantics<parallel>], iteration_bounds = array<i64: 2>, scalar_prefetch = 0 : i64, scratch_operands = 0 : i64, tpu.core_type = #tpu.core_type<tc>, window_params = [{transform_indices = @transform_0, window_bounds = array<i64: 1, 32, 8>}, {pipeline_mode = #tpu.pipeline_mode<synchronous>, transform_indices = @transform_1, window_bounds = array<i64: 8, 32>}, {pipeline_mode = #tpu.pipeline_mode<synchronous>, transform_indices = @transform_2, window_bounds = array<i64: 1, 32>}, {pipeline_mode = #tpu.pipeline_mode<synchronous>, transform_indices = @transform_3, window_bounds = array<i64: 32, 32>}, {pipeline_mode = #tpu.pipeline_mode<synchronous>, transform_indices = @transform_4, window_bounds = array<i64: 1, 32>}, {pipeline_mode = #tpu.pipeline_mode<synchronous>, transform_indices = @transform_5, window_bounds = array<i64: 1, 32>}, {transform_indices = @transform_6, window_bounds = array<i64: 1, 32, 32>}]} {
    %c0 = arith.constant 0 : index
    %c0_0 = arith.constant 0 : index
    %c0_1 = arith.constant 0 : index
    %0 = vector.load %arg1[%c0, %c0_0, %c0_1] : memref<1x32x8xf32, #tpu.memory_space<vmem>>, vector<1x32x8xf32>
    %1 = vector.shape_cast %0 : vector<1x32x8xf32> to vector<32x8xf32>
    %c0_2 = arith.constant 0 : index
    %c0_3 = arith.constant 0 : index
    %2 = vector.load %arg2[%c0_2, %c0_3] : memref<8x32xf32, #tpu.memory_space<vmem>>, vector<8x32xf32>
    %cst = arith.constant dense<0.000000e+00> : vector<32x32xf32>
    %3 = tpu.matmul %1, %2, %cst {dimension_numbers = #tpu.dot_dimension_numbers<[1], [0], [0], [1], [0, 0, 1, 1], [], []>} : vector<32x8xf32>, vector<8x32xf32>, vector<32x32xf32> -> vector<32x32xf32>
    %c0_4 = arith.constant 0 : index
    %c0_5 = arith.constant 0 : index
    %4 = vector.load %arg3[%c0_4, %c0_5] : memref<1x32xf32, #tpu.memory_space<vmem>>, vector<1x32xf32>
    %5 = vector.broadcast %4 : vector<1x32xf32> to vector<32x32xf32>
    %6 = arith.addf %3, %5 : vector<32x32xf32>
    %c0_6 = arith.constant 0 : index
    %c0_7 = arith.constant 0 : index
    %7 = vector.load %arg4[%c0_6, %c0_7] : memref<32x32xf32, #tpu.memory_space<vmem>>, vector<32x32xf32>
    %8 = arith.addf %6, %7 : vector<32x32xf32>
    %c0_8 = arith.constant 0 : index
    %c0_9 = arith.constant 0 : index
    %9 = vector.load %arg5[%c0_8, %c0_9] : memref<1x32xf32, #tpu.memory_space<vmem>>, vector<1x32xf32>
    %c0_10 = arith.constant 0 : index
    %c0_11 = arith.constant 0 : index
    %10 = vector.load %arg6[%c0_10, %c0_11] : memref<1x32xf32, #tpu.memory_space<vmem>>, vector<1x32xf32>
    %cst_12 = arith.constant dense<0.000000e+00> : vector<32xf32>
    %11 = vector.multi_reduction <add>, %8, %cst_12 [1] : vector<32x32xf32> to vector<32xf32>
    %12 = vector.shape_cast %11 : vector<32xf32> to vector<32x1xf32>
    %cst_13 = arith.constant 3.200000e+01 : f32
    %13 = vector.broadcast %cst_13 : f32 to vector<32x1xf32>
    %14 = arith.divf %12, %13 : vector<32x1xf32>
    %15 = vector.broadcast %14 : vector<32x1xf32> to vector<32x32xf32>
    %16 = arith.subf %8, %15 : vector<32x32xf32>
    %17 = arith.mulf %16, %16 : vector<32x32xf32>
    %cst_14 = arith.constant dense<0.000000e+00> : vector<32xf32>
    %18 = vector.multi_reduction <add>, %17, %cst_14 [1] : vector<32x32xf32> to vector<32xf32>
    %19 = vector.shape_cast %18 : vector<32xf32> to vector<32x1xf32>
    %cst_15 = arith.constant 3.200000e+01 : f32
    %20 = vector.broadcast %cst_15 : f32 to vector<32x1xf32>
    %21 = arith.divf %19, %20 : vector<32x1xf32>
    %22 = vector.broadcast %14 : vector<32x1xf32> to vector<32x32xf32>
    %23 = arith.subf %8, %22 : vector<32x32xf32>
    %cst_16 = arith.constant 9.99999974E-6 : f32
    %24 = vector.broadcast %cst_16 : f32 to vector<32x1xf32>
    %25 = arith.addf %21, %24 : vector<32x1xf32>
    %26 = math.rsqrt %25 : vector<32x1xf32>
    %27 = vector.broadcast %26 : vector<32x1xf32> to vector<32x32xf32>
    %28 = arith.mulf %23, %27 : vector<32x32xf32>
    %29 = vector.broadcast %9 : vector<1x32xf32> to vector<32x32xf32>
    %30 = arith.mulf %28, %29 : vector<32x32xf32>
    %31 = vector.broadcast %10 : vector<1x32xf32> to vector<32x32xf32>
    %32 = arith.addf %30, %31 : vector<32x32xf32>
    %c0_17 = arith.constant 0 : index
    %c0_18 = arith.constant 0 : index
    %c0_19 = arith.constant 0 : index
    %33 = vector.load %arg7[%c0_17, %c0_18, %c0_19] : memref<1x32x32xf32, #tpu.memory_space<vmem>>, vector<1x32x32xf32>
    %34 = vector.shape_cast %33 : vector<1x32x32xf32> to vector<32x32xf32>
    %35 = vector.shape_cast %32 : vector<32x32xf32> to vector<1x32x32xf32>
    tpu.vector_store %arg7[%c0_17, %c0_18, %c0_19], %35 {strides = array<i32>} : memref<1x32x32xf32, #tpu.memory_space<vmem>>, vector<1x32x32xf32>,
    return
  }
  func.func @transform_0(%arg0: i32) -> (i32, i32, i32) {
    %c0_i32 = arith.constant 0 : i32
    %c0_i32_0 = arith.constant 0 : i32
    %c0_i32_1 = arith.constant 0 : i32
    return %arg0, %c0_i32, %c0_i32_0 : i32, i32, i32
  }
  func.func @transform_1(%arg0: i32) -> (i32, i32) {
    %c0_i32 = arith.constant 0 : i32
    %c0_i32_0 = arith.constant 0 : i32
    %c0_i32_1 = arith.constant 0 : i32
    return %c0_i32, %c0_i32_0 : i32, i32
  }
  func.func @transform_2(%arg0: i32) -> (i32, i32) {
    %c0_i32 = arith.constant 0 : i32
    %c0_i32_0 = arith.constant 0 : i32
    %c0_i32_1 = arith.constant 0 : i32
    return %c0_i32, %c0_i32_0 : i32, i32
  }
  func.func @transform_3(%arg0: i32) -> (i32, i32) {
    %c0_i32 = arith.constant 0 : i32
    %c0_i32_0 = arith.constant 0 : i32
    %c0_i32_1 = arith.constant 0 : i32
    return %c0_i32, %c0_i32_0 : i32, i32
  }
  func.func @transform_4(%arg0: i32) -> (i32, i32) {
    %c0_i32 = arith.constant 0 : i32
    %c0_i32_0 = arith.constant 0 : i32
    %c0_i32_1 = arith.constant 0 : i32
    return %c0_i32, %c0_i32_0 : i32, i32
  }
  func.func @transform_5(%arg0: i32) -> (i32, i32) {
    %c0_i32 = arith.constant 0 : i32
    %c0_i32_0 = arith.constant 0 : i32
    %c0_i32_1 = arith.constant 0 : i32
    return %c0_i32, %c0_i32_0 : i32, i32
  }
  func.func @transform_6(%arg0: i32) -> (i32, i32, i32) {
    %c0_i32 = arith.constant 0 : i32
    %c0_i32_0 = arith.constant 0 : i32
    %c0_i32_1 = arith.constant 0 : i32
    return %arg0, %c0_i32, %c0_i32_0 : i32, i32, i32
  }
}

</mosaic_0001>

<llo_original>
// kernel: tpu_custom_call.1
$region0: #{tpu_custom_call.1}
  #allocation0 [shape = 'u32[]', space=smem, size = 0x4, offset = 0x4, fixed_abs, tag = 'smem constant byte address 0x4 - core index']
  #allocation1 [shape = 'u32[72,128]{1,0:T(1,128)}', space=vmem, size = 0x9000, scoped, tag = 'internal scratch']
  %s0 = inlined_call_operand.vmem [shape: f32[2,32,8], index: 0, kind: input, shape index: {}]
  %s1 = inlined_call_operand.vmem [shape: f32[8,32], index: 1, kind: input, shape index: {}]
  %s2 = inlined_call_operand.vmem [shape: f32[1,32], index: 2, kind: input, shape index: {}]
  %s3 = inlined_call_operand.vmem [shape: f32[32,32], index: 3, kind: input, shape index: {}]
  %s4 = inlined_call_operand.vmem [shape: f32[1,32], index: 4, kind: input, shape index: {}]
  %s5 = inlined_call_operand.vmem [shape: f32[1,32], index: 5, kind: input, shape index: {}]
  %s6 = inlined_call_operand.hbm [shape: f32[2,32,32], index: 6, kind: output, shape index: {}]
  %s7 = sld [smem:[#allocation0]]
  $region57: #{tpu_custom_call.1} parent=0
    _
  %s9 = ssub.s32 1, %s7
  %s10 = scalar_select 0, %s9, %s7
  $region1: #{tpu_custom_call.1} parent=0
    #allocation2 [shape = 'u8[32768]{0}', space=vmem, size = 0x8000, scoped, tag = 'output window, operand 0']
    #allocation3 [shape = 's32[2]{0}', space=sflag, size = 0x8, scoped, tag = 'scoped memory for tpu_custom_call.1']
    %11 = vsyncpa [#allocation3], 0
    %s12 = scalar_lea.sflag [#allocation3], 1
    %13 = vsyncpa %s12, 0
    loop: start=0, step=1, limit=4
    $region2: #{tpu_custom_call.1} parent=1 // loop_pre_header
      _
    $region3: #{tpu_custom_call.1} parent=1 // loop_header
      %s15 = sphi 0, %s19
      %p16 = scmp.ge.s32.totalorder %s15, 4
      %s25 = sphi 0, %s27
      %s28 = sphi 0, %s25
      %s29 = sphi 0, %s28
      %s45 = sphi 0, %s29
      %s49 = sphi 0, %s49
      %s51 = sphi 0, %s49
      %s52 = sphi 0, %s51
      %s66 = sphi 0, %s52
      %s70 = sphi 0, %s70
      %s72 = sphi 0, %s70
      %s73 = sphi 0, %s72
      %s87 = sphi 0, %s73
      %s91 = sphi 0, %s91
      %s93 = sphi 0, %s91
      %s94 = sphi 0, %s93
      %s108 = sphi 0, %s94
      %s112 = sphi 0, %s112
      %s114 = sphi 0, %s112
      %s115 = sphi 0, %s114
      %s129 = sphi 0, %s115
      %s133 = sphi 0, %s133
      %s135 = sphi 0, %s133
      %s136 = sphi 0, %s135
      %s150 = sphi 0, %s136
      %s156 = sphi 0, %s158
      %s159 = sphi 0, %s156
      %s160 = sphi 0, %s159
      %s176 = sphi 0, %s160
    $region4: #{tpu_custom_call.1} parent=1 // loop_header_branch
      %18 = sbr.rel (%p16) target = $region8
    $region5: #{tpu_custom_call.1} parent=1 // loop_body
      %s20 = ssub.s32 %s15, 1
      %s21 = ssub.s32 %s15, 2
      %s22 = sadd.s32 %s15, 1
      %s23 = ssub.s32 %s15, %s22
      %p24 = scmp.eq.s32.totalorder %s23, 0
      %s26 = sadd.s32 %s25, 1
      %s27 = scalar_select %p24, %s25, %s26
      %p30 = pneg %p24
      %p31 = scmp.eq.s32.totalorder %s15, 1
      %p32 = por %p30, %p31
      %p33 = scmp.ne.s32.totalorder %s25, %s28
      %p34 = scmp.eq.s32.totalorder %s15, 0
      %p35 = por %p33, %p34
      %p36 = scmp.ne.s32.totalorder %s25, %s28
      %p37 = scmp.eq.s32.totalorder %s20, 1
      %p38 = por %p36, %p37
      %p39 = scmp.ne.s32.totalorder %s28, %s29
      %p40 = scmp.eq.s32.totalorder %s20, 0
      %p41 = por %p39, %p40
      %p42 = scmp.ne.s32.totalorder %s28, %s29
      %p43 = scmp.eq.s32.totalorder %s21, 1
      %p44 = por %p42, %p43
      %p46 = scmp.ne.s32.totalorder %s29, %s45
      %p47 = scmp.eq.s32.totalorder %s21, 0
      %p48 = por %p46, %p47
      %s50 = sadd.s32 %s49, 1
      %p53 = scmp.eq.s32.totalorder %s15, 1
      %p54 = scmp.ne.s32.totalorder %s49, %s51
      %p55 = scmp.eq.s32.totalorder %s15, 0
      %p56 = por %p54, %p55
      %p57 = scmp.ne.s32.totalorder %s49, %s51
      %p58 = scmp.eq.s32.totalorder %s20, 1
      %p59 = por %p57, %p58
      %p60 = scmp.ne.s32.totalorder %s51, %s52
      %p61 = scmp.eq.s32.totalorder %s20, 0
      %p62 = por %p60, %p61
      %p63 = scmp.ne.s32.totalorder %s51, %s52
      %p64 = scmp.eq.s32.totalorder %s21, 1
      %p65 = por %p63, %p64
      %p67 = scmp.ne.s32.totalorder %s52, %s66
      %p68 = scmp.eq.s32.totalorder %s21, 0
      %p69 = por %p67, %p68
      %s71 = sadd.s32 %s70, 1
      %p74 = scmp.eq.s32.totalorder %s15, 1
      %p75 = scmp.ne.s32.totalorder %s70, %s72
      %p76 = scmp.eq.s32.totalorder %s15, 0
      %p77 = por %p75, %p76
      %p78 = scmp.ne.s32.totalorder %s70, %s72
      %p79 = scmp.eq.s32.totalorder %s20, 1
      %p80 = por %p78, %p79
      %p81 = scmp.ne.s32.totalorder %s72, %s73
      %p82 = scmp.eq.s32.totalorder %s20, 0
      %p83 = por %p81, %p82
      %p84 = scmp.ne.s32.totalorder %s72, %s73
      %p85 = scmp.eq.s32.totalorder %s21, 1
      %p86 = por %p84, %p85
      %p88 = scmp.ne.s32.totalorder %s73, %s87
      %p89 = scmp.eq.s32.totalorder %s21, 0
      %p90 = por %p88, %p89
      %s92 = sadd.s32 %s91, 1
      %p95 = scmp.eq.s32.totalorder %s15, 1
      %p96 = scmp.ne.s32.totalorder %s91, %s93
      %p97 = scmp.eq.s32.totalorder %s15, 0
      %p98 = por %p96, %p97
      %p99 = scmp.ne.s32.totalorder %s91, %s93
      %p100 = scmp.eq.s32.totalorder %s20, 1
      %p101 = por %p99, %p100
      %p102 = scmp.ne.s32.totalorder %s93, %s94
      %p103 = scmp.eq.s32.totalorder %s20, 0
      %p104 = por %p102, %p103
      %p105 = scmp.ne.s32.totalorder %s93, %s94
      %p106 = scmp.eq.s32.totalorder %s21, 1
      %p107 = por %p105, %p106
      %p109 = scmp.ne.s32.totalorder %s94, %s108
      %p110 = scmp.eq.s32.totalorder %s21, 0
      %p111 = por %p109, %p110
      %s113 = sadd.s32 %s112, 1
      %p116 = scmp.eq.s32.totalorder %s15, 1
      %p117 = scmp.ne.s32.totalorder %s112, %s114
      %p118 = scmp.eq.s32.totalorder %s15, 0
      %p119 = por %p117, %p118
      %p120 = scmp.ne.s32.totalorder %s112, %s114
      %p121 = scmp.eq.s32.totalorder %s20, 1
      %p122 = por %p120, %p121
      %p123 = scmp.ne.s32.totalorder %s114, %s115
      %p124 = scmp.eq.s32.totalorder %s20, 0
      %p125 = por %p123, %p124
      %p126 = scmp.ne.s32.totalorder %s114, %s115
      %p127 = scmp.eq.s32.totalorder %s21, 1
      %p128 = por %p126, %p127
      %p130 = scmp.ne.s32.totalorder %s115, %s129
      %p131 = scmp.eq.s32.totalorder %s21, 0
      %p132 = por %p130, %p131
      %s134 = sadd.s32 %s133, 1
      %p137 = scmp.eq.s32.totalorder %s15, 1
      %p138 = scmp.ne.s32.totalorder %s133, %s135
      %p139 = scmp.eq.s32.totalorder %s15, 0
      %p140 = por %p138, %p139
      %p141 = scmp.ne.s32.totalorder %s133, %s135
      %p142 = scmp.eq.s32.totalorder %s20, 1
      %p143 = por %p141, %p142
      %p144 = scmp.ne.s32.totalorder %s135, %s136
      %p145 = scmp.eq.s32.totalorder %s20, 0
      %p146 = por %p144, %p145
      %p147 = scmp.ne.s32.totalorder %s135, %s136
      %p148 = scmp.eq.s32.totalorder %s21, 1
      %p149 = por %p147, %p148
      %p151 = scmp.ne.s32.totalorder %s136, %s150
      %p152 = scmp.eq.s32.totalorder %s21, 0
      %p153 = por %p151, %p152
      %s154 = ssub.s32 %s15, %s22
      %p155 = scmp.eq.s32.totalorder %s154, 0
      %s157 = sadd.s32 %s156, 1
      %s158 = scalar_select %p155, %s156, %s157
      %p161 = pneg %p155
      %p162 = scmp.eq.s32.totalorder %s15, 1
      %p163 = por %p161, %p162
      %p164 = scmp.ne.s32.totalorder %s156, %s159
      %p165 = scmp.eq.s32.totalorder %s15, 0
      %p166 = por %p164, %p165
      %p167 = scmp.ne.s32.totalorder %s156, %s159
      %p168 = scmp.eq.s32.totalorder %s20, 1
      %p169 = por %p167, %p168
      %p170 = scmp.ne.s32.totalorder %s159, %s160
      %p171 = scmp.eq.s32.totalorder %s20, 0
      %p172 = por %p170, %p171
      %p173 = scmp.ne.s32.totalorder %s159, %s160
      %p174 = scmp.eq.s32.totalorder %s21, 1
      %p175 = por %p173, %p174
      %p177 = scmp.ne.s32.totalorder %s160, %s176
      %p178 = scmp.eq.s32.totalorder %s21, 0
      %p179 = por %p177, %p178
      %p180 = scmp.le.s32.totalorder 1, %s15
      %p181 = scmp.lt.s32.totalorder %s15, 3
      %p182 = pnand %p180, %p181
      %p183 = pneg %p182
      // Predicated region
      $region9: #{tpu_custom_call.1} parent=5 // pred_check
        _
      $region10: #{tpu_custom_call.1} parent=5 // pred_check_branch
        %185 = sbr.rel (%p182) target = $region12
      $region11: #{tpu_custom_call.1} parent=5 // pred_region
        %s186 = ssub.s32 %s15, 1
        // Predicated region
        $region13: #{tpu_custom_call.1} parent=11 // pred_check
          %p187 = pneg %p62
        $region14: #{tpu_custom_call.1} parent=11 // pred_check_branch
          %189 = sbr.rel (%p187) target = $region16
        $region15: #{tpu_custom_call.1} parent=11 // pred_region
          _
        $region16: #{tpu_custom_call.1} parent=11 // pred_fallthru
          _
        // Predicated region
        $region17: #{tpu_custom_call.1} parent=11 // pred_check
          %p190 = pneg %p83
        $region18: #{tpu_custom_call.1} parent=11 // pred_check_branch
          %192 = sbr.rel (%p190) target = $region20
        $region19: #{tpu_custom_call.1} parent=11 // pred_region
          _
        $region20: #{tpu_custom_call.1} parent=11 // pred_fallthru
          _
        // Predicated region
        $region21: #{tpu_custom_call.1} parent=11 // pred_check
          %p193 = pneg %p104
        $region22: #{tpu_custom_call.1} parent=11 // pred_check_branch
          %195 = sbr.rel (%p193) target = $region24
        $region23: #{tpu_custom_call.1} parent=11 // pred_region
          _
        $region24: #{tpu_custom_call.1} parent=11 // pred_fallthru
          _
        // Predicated region
        $region25: #{tpu_custom_call.1} parent=11 // pred_check
          %p196 = pneg %p125
        $region26: #{tpu_custom_call.1} parent=11 // pred_check_branch
          %198 = sbr.rel (%p196) target = $region28
        $region27: #{tpu_custom_call.1} parent=11 // pred_region
          _
        $region28: #{tpu_custom_call.1} parent=11 // pred_fallthru
          _
        // Predicated region
        $region29: #{tpu_custom_call.1} parent=11 // pred_check
          %p199 = pneg %p146
        $region30: #{tpu_custom_call.1} parent=11 // pred_check_branch
          %201 = sbr.rel (%p199) target = $region32
        $region31: #{tpu_custom_call.1} parent=11 // pred_region
          _
        $region32: #{tpu_custom_call.1} parent=11 // pred_fallthru
          _
      $region12: #{tpu_custom_call.1} parent=5 // pred_fallthru
        _
      %p202 = scmp.lt.s32.totalorder %s15, 2
      // Predicated region
      $region33: #{tpu_custom_call.1} parent=5 // pred_check
        %p203 = pneg %p202
      $region34: #{tpu_custom_call.1} parent=5 // pred_check_branch
        %205 = sbr.rel (%p203) target = $region36
      $region35: #{tpu_custom_call.1} parent=5 // pred_region
        // Predicated region
        $region37: #{tpu_custom_call.1} parent=35 // pred_check
          %p206 = pneg %p35
        $region38: #{tpu_custom_call.1} parent=35 // pred_check_branch
          %208 = sbr.rel (%p206) target = $region40
        $region39: #{tpu_custom_call.1} parent=35 // pred_region
          %p209 = scmp.lt.s32.totalorder %s15, 1
          %s210 = scalar_select %p209, %s15, 1
          %s211 = smul.addr %s210, 4
          %s212 = smul.addr %s211, 8
          %s213 = scalar_lea.vmem %s0, %s212
        $region40: #{tpu_custom_call.1} parent=35 // pred_fallthru
          _
      $region36: #{tpu_custom_call.1} parent=5 // pred_fallthru
        _
      %p214 = scmp.le.s32.totalorder 1, %s15
      %p215 = scmp.lt.s32.totalorder %s15, 3
      %p216 = pnand %p214, %p215
      %p217 = pneg %p216
      // Predicated region
      $region41: #{tpu_custom_call.1} parent=5 // pred_check
        _
      $region42: #{tpu_custom_call.1} parent=5 // pred_check_branch
        %219 = sbr.rel (%p216) target = $region44
      $region43: #{tpu_custom_call.1} parent=5 // pred_region
        %s220 = ssub.s32 %s15, 1
        %p221 = scmp.lt.s32.totalorder %s20, 1
        %s222 = scalar_select %p221, %s20, 1
        %s223 = smul.addr %s222, 4
        %s224 = smul.addr %s223, 8
        %s225 = scalar_lea.vmem %s0, %s224
        %p226 = pneg %p41
        %p227 = pneg %p38
        %p228 = pneg %p62
        %p229 = pneg %p59
        %p230 = pneg %p83
        %p231 = pneg %p80
        %p232 = pneg %p104
        %p233 = pneg %p101
        %p234 = pneg %p125
        %p235 = pneg %p122
        %p236 = pneg %p146
        %p237 = pneg %p143
        %p238 = pneg %p172
        %p239 = pneg %p169
        %s240 = sand.u32 %s159, 1
        %s241 = scalar_lea.sflag [#allocation3], %s240
        %s242 = sand.u32 %s159, 1
        %s243 = smul.addr %s242, 32
        %s244 = scalar_lea.vmem [#allocation2], %s243
        %p245 = scmp.lt.s32.totalorder %s20, 1
        %s246 = scalar_select %p245, %s20, 1
        %s247 = smul.addr %s246, 4
        %s248 = smul.addr %s247, 8
        %s249 = scalar_lea.vmem %s0, %s248
        %v250 = vld [vmem:[%s249] sm:$0xff]
        %v251 = vld [vmem:[%s249 + $0x8] sm:$0xff]
        %v252 = vld [vmem:[%s249 + $0x10] sm:$0xff]
        %v253 = vld [vmem:[%s249 + $0x18] sm:$0xff]
        %v254 = vld [vmem:[%s1] sm:$0xff]
        %v255 = vld [vmem:[%s2] sm:$0x1]
        %v257 = vperm.slane %v255, 0
        %vm259 = vcmask 64512
        %v261 = vsel %vm259, %v250, 0
        %v264 = vsel %vm259, %v251, 0
        %v267 = vsel %vm259, %v252, 0
        %v270 = vsel %vm259, %v253, 0
        %272 = vmatpush.msra.mxu0 0.0
        %273 = vmatpush.msra.mxu0 0.0
        %274 = vmatpush.msra.mxu0 0.0
        %275 = vmatpush.msra.mxu0 0.0
        %276 = vmatpush.msra.mxu0 0.0
        %277 = vmatpush.msra.mxu0 0.0
        %278 = vmatpush.msra.mxu0 0.0
        %279 = vmatpush.msra.mxu0 0.0
        %280 = vmatpush.msra.mxu0 0.0
        %281 = vmatpush.msra.mxu0 0.0
        %282 = vmatpush.msra.mxu0 0.0
        %283 = vmatpush.msra.mxu0 0.0
        %284 = vmatpush.msra.mxu0 0.0
        %285 = vmatpush.msra.mxu0 0.0
        %286 = vmatpush.msra.mxu0 0.0
        %287 = vmatpush.msra.mxu0 %v254
        %288 = vmatmul.f32.gmra.mxu0 %v261
        %v289 = vpop.f32.mrf.mxu0
        %v290 = vadd.f32 %v257, %v289
        %291 = vmatmul.f32.gmra.mxu0 %v264
        %v292 = vpop.f32.mrf.mxu0
        %v293 = vadd.f32 %v257, %v292
        %294 = vmatmul.f32.gmra.mxu0 %v267
        %v295 = vpop.f32.mrf.mxu0
        %v296 = vadd.f32 %v257, %v295
        %297 = vmatmul.f32.gmra.mxu0 %v270
        %v298 = vpop.f32.mrf.mxu0
        %v299 = vadd.f32 %v257, %v298
        %300 = vdwg.mxu0
        %v301 = vld [vmem:[%s3] sm:$0xff]
        %v302 = vld [vmem:[%s3 + $0x8] sm:$0xff]
        %v303 = vld [vmem:[%s3 + $0x10] sm:$0xff]
        %v304 = vld [vmem:[%s3 + $0x18] sm:$0xff]
        %v305 = vadd.f32 %v290, %v301
        %v306 = vadd.f32 %v293, %v302
        %v307 = vadd.f32 %v296, %v303
        %v308 = vadd.f32 %v299, %v304
        %v309 = vld [vmem:[%s4] sm:$0x1]
        %v310 = vld [vmem:[%s5] sm:$0x1]
        %vm311 = vcmask 261120
        %v312 = vsel %vm311, %v305, 0.0
        %313 = vadd.xlane.f32.xlu0 %v312
        %v314 = vpop.xlane.xlu0 %313
        %v315 = vsel %vm311, %v306, 0.0
        %316 = vadd.xlane.f32.xlu0 %v315
        %v317 = vpop.xlane.xlu0 %316
        %v318 = vsel %vm311, %v307, 0.0
        %319 = vadd.xlane.f32.xlu0 %v318
        %v320 = vpop.xlane.xlu0 %319
        %v321 = vsel %vm311, %v308, 0.0
        %322 = vadd.xlane.f32.xlu0 %v321
        %v323 = vpop.xlane.xlu0 %322
        %v324 = vrcp.pop 32.0
        %v325 = vmul.f32 32.0, %v324
        %v326 = vsub.f32 1.0, %v325
        %v327 = vmul.f32 %v324, %v326
        %v328 = vadd.f32 %v324, %v327
        %vm329 = vweird.f32 %v324
        %v330 = vsel %vm329, %v324, %v328
        %v331 = vmul.f32 %v314, %v330
        %v332 = vmul.f32 %v317, %v330
        %v333 = vmul.f32 %v320, %v330
        %v334 = vmul.f32 %v323, %v330
        %v335 = vsub.f32 %v305, %v331
        %v336 = vsub.f32 %v306, %v332
        %v337 = vsub.f32 %v307, %v333
        %v338 = vsub.f32 %v308, %v334
        %v339 = vmul.f32 %v335, %v335
        %v340 = vmul.f32 %v336, %v336
        %v341 = vmul.f32 %v337, %v337
        %v342 = vmul.f32 %v338, %v338
        %v343 = vsel %vm311, %v339, 0.0
        %344 = vadd.xlane.f32.xlu0 %v343
        %v345 = vpop.xlane.xlu0 %344
        %v346 = vsel %vm311, %v340, 0.0
        %347 = vadd.xlane.f32.xlu0 %v346
        %v348 = vpop.xlane.xlu0 %347
        %v349 = vsel %vm311, %v341, 0.0
        %350 = vadd.xlane.f32.xlu0 %v349
        %v351 = vpop.xlane.xlu0 %350
        %v352 = vsel %vm311, %v342, 0.0
        %353 = vadd.xlane.f32.xlu0 %v352
        %v354 = vpop.xlane.xlu0 %353
        %v355 = vmul.f32 %v345, %v330
        %v356 = vmul.f32 %v348, %v330
        %v357 = vmul.f32 %v351, %v330
        %v358 = vmul.f32 %v354, %v330
        %v359 = vadd.f32 %v355, 1e-05
        %v360 = vadd.f32 %v356, 1e-05
        %v361 = vadd.f32 %v357, 1e-05
        %v362 = vadd.f32 %v358, 1e-05
        %v363 = vrsqrt.pop %v359
        %v364 = vmul.f32 %v363, %v359
        %v365 = vmul.f32 %v364, %v363
        %v366 = vmul.f32 0.5, %v365
        %v367 = vsub.f32 1.5, %v366
        %v368 = vmul.f32 %v363, %v367
        %vm369 = vweird.f32 %v359
        %vm370 = vweird.f32 %v363
        %vm371 = vmor %vm369, %vm370
        %v372 = vsel %vm371, %v363, %v368
        %v373 = vrsqrt.pop %v360
        %v374 = vmul.f32 %v373, %v360
        %v375 = vmul.f32 %v374, %v373
        %v376 = vmul.f32 0.5, %v375
        %v377 = vsub.f32 1.5, %v376
        %v378 = vmul.f32 %v373, %v377
        %vm379 = vweird.f32 %v360
        %vm380 = vweird.f32 %v373
        %vm381 = vmor %vm379, %vm380
        %v382 = vsel %vm381, %v373, %v378
        %v383 = vrsqrt.pop %v361
        %v384 = vmul.f32 %v383, %v361
        %v385 = vmul.f32 %v384, %v383
        %v386 = vmul.f32 0.5, %v385
        %v387 = vsub.f32 1.5, %v386
        %v388 = vmul.f32 %v383, %v387
        %vm389 = vweird.f32 %v361
        %vm390 = vweird.f32 %v383
        %vm391 = vmor %vm389, %vm390
        %v392 = vsel %vm391, %v383, %v388
        %v393 = vrsqrt.pop %v362
        %v394 = vmul.f32 %v393, %v362
        %v395 = vmul.f32 %v394, %v393
        %v396 = vmul.f32 0.5, %v395
        %v397 = vsub.f32 1.5, %v396
        %v398 = vmul.f32 %v393, %v397
        %vm399 = vweird.f32 %v362
        %vm400 = vweird.f32 %v393
        %vm401 = vmor %vm399, %vm400
        %v402 = vsel %vm401, %v393, %v398
        %v403 = vmul.f32 %v335, %v372
        %v404 = vmul.f32 %v336, %v382
        %v405 = vmul.f32 %v337, %v392
        %v406 = vmul.f32 %v338, %v402
        %v408 = vperm.slane %v309, 0
        %v410 = vmul.f32 %v403, %v408
        %v411 = vmul.f32 %v404, %v408
        %v412 = vmul.f32 %v405, %v408
        %v413 = vmul.f32 %v406, %v408
        %v415 = vperm.slane %v310, 0
        %v417 = vadd.f32 %v410, %v415
        %v418 = vadd.f32 %v411, %v415
        %v419 = vadd.f32 %v412, %v415
        %v420 = vadd.f32 %v413, %v415
        %421 = vst.msk [vmem:[%s244] sm:$0xff] %vm311, %v417
        %422 = vst.msk [vmem:[%s244 + $0x8] sm:$0xff] %vm311, %v418
        %423 = vst.msk [vmem:[%s244 + $0x10] sm:$0xff] %vm311, %v419
        %424 = vst.msk [vmem:[%s244 + $0x18] sm:$0xff] %vm311, %v420
        %s425 = sand.u32 %s159, 1
        %s426 = scalar_lea.sflag [#allocation3], %s425
        %s427 = sand.u32 %s159, 1
        %s428 = smul.addr %s427, 32
        %s429 = scalar_lea.vmem [#allocation2], %s428
        // Predicated region
        $region45: #{tpu_custom_call.1} parent=43 // pred_check
          %p430 = pneg %p169
        $region46: #{tpu_custom_call.1} parent=43 // pred_check_branch
          %432 = sbr.rel (%p430) target = $region48
        $region47: #{tpu_custom_call.1} parent=43 // pred_region
          %434 = vsyncadd %s426, 0
          %s435 = smul.addr %s20, 4
          %s436 = smul.addr %s435, 8
          %s437 = scalar_lea.hbm %s6, %s436
          %s438 = sshll.u32 %s429, 4
          %s439 = int_to_ptr.vmem [resolvable:$true] %s438
          %s440 = sshll.u32 %s437, 4
          %s441 = int_to_ptr.hbm [resolvable:$true] %s440
          %446 = dma.vmem_to_hbm [thread:$0]  %s439, 512, %s441, %s426, 128, 128, 8
        $region48: #{tpu_custom_call.1} parent=43 // pred_fallthru
          _
      $region44: #{tpu_custom_call.1} parent=5 // pred_fallthru
        _
      %p447 = scmp.le.s32.totalorder 2, %s15
      // Predicated region
      $region49: #{tpu_custom_call.1} parent=5 // pred_check
        %p448 = pneg %p447
      $region50: #{tpu_custom_call.1} parent=5 // pred_check_branch
        %450 = sbr.rel (%p448) target = $region52
      $region51: #{tpu_custom_call.1} parent=5 // pred_region
        %s451 = ssub.s32 %s15, 2
        // Predicated region
        $region53: #{tpu_custom_call.1} parent=51 // pred_check
          %p452 = pneg %p175
        $region54: #{tpu_custom_call.1} parent=51 // pred_check_branch
          %454 = sbr.rel (%p452) target = $region56
        $region55: #{tpu_custom_call.1} parent=51 // pred_region
          %s455 = sand.u32 %s160, 1
          %s456 = scalar_lea.sflag [#allocation3], %s455
          %s457 = sand.u32 %s160, 1
          %s458 = smul.addr %s457, 32
          %s459 = scalar_lea.vmem [#allocation2], %s458
          %461 = dma.done %s456, 512
        $region56: #{tpu_custom_call.1} parent=51 // pred_fallthru
          _
      $region52: #{tpu_custom_call.1} parent=5 // pred_fallthru
        _
    $region6: #{tpu_custom_call.1} parent=1 // loop_footer
      %s19 = sadd.s32 1, %s15
    $region7: #{tpu_custom_call.1} parent=1 // loop_footer_branch
      %14 = sbr.rel target = $region3
    $region8: #{tpu_custom_call.1} parent=1 // loop_exit
      _
    %462 = vsyncpa [#allocation3], 1
    %s463 = scalar_lea.sflag [#allocation3], 1
    %464 = vsyncpa %s463, 1

</llo_original>
